<compile_context>
chip_gen: v7x
topology: tpu7x:2x2x1
jax: 0.10.0
libtpu: 0.0.40
codegen_flags: <defaults>
</compile_context>

<pallas_src>
import functools
import math

import jax
import jax.numpy as jnp
from jax import lax
from jax.experimental import pallas as pl
from jax.experimental.pallas import tpu as pltpu


def _round_up(x, m):
    return (x + m - 1) // m * m


def _gelu_exact(x):
    # Matches torch.nn.functional.gelu default (erf-based, not tanh approx).
    return 0.5 * x * (1.0 + lax.erf(x * (1.0 / math.sqrt(2.0))))


# ----------------------------------------------------------------------------
# Kernels
# ----------------------------------------------------------------------------
def ff_kernel_scratch(x_ref, w1_ref, b1_ref, w2_ref, b2_ref, o_ref, acc_ref):
    """General path: f32 VMEM accumulator, output cast at the last dff step."""
    n = pl.program_id(1)

    @pl.when(n == 0)
    def _():
        acc_ref[...] = jnp.zeros_like(acc_ref)

    h = jnp.dot(x_ref[...], w1_ref[...], preferred_element_type=jnp.float32)
    h = _gelu_exact(h + b1_ref[...].astype(jnp.float32))
    # dropout (eval mode) == identity
    h = h.astype(w2_ref.dtype)
    acc_ref[...] += jnp.dot(h, w2_ref[...], preferred_element_type=jnp.float32)

    @pl.when(n == pl.num_programs(1) - 1)
    def _():
        out = acc_ref[...] + b2_ref[...].astype(jnp.float32)
        o_ref[...] = out.astype(o_ref.dtype)


def ff_kernel_f32out(x_ref, w1_ref, b1_ref, w2_ref, b2_ref, o_ref):
    """f32-output path: accumulate directly into the resident output tile
    (its block index is constant across the dff axis), saving the f32 scratch."""
    n = pl.program_id(1)

    h = jnp.dot(x_ref[...], w1_ref[...], preferred_element_type=jnp.float32)
    h = _gelu_exact(h + b1_ref[...].astype(jnp.float32))
    # dropout (eval mode) == identity
    h = h.astype(w2_ref.dtype)
    contrib = jnp.dot(h, w2_ref[...], preferred_element_type=jnp.float32)

    @pl.when(n == 0)
    def _():
        o_ref[...] = contrib

    @pl.when(n != 0)
    def _():
        o_ref[...] += contrib

    @pl.when(n == pl.num_programs(1) - 1)
    def _():
        o_ref[...] += b2_ref[...].astype(jnp.float32)


# ----------------------------------------------------------------------------
# Tile selection / VMEM budgeting
# ----------------------------------------------------------------------------
@functools.lru_cache(maxsize=1)
def _vmem_capacity_bytes():
    try:
        return int(pltpu.get_tpu_info().vmem_capacity_bytes)
    except Exception:
        # Conservative fallback that is safe on every generation (v7x has 64 MiB).
        return 64 * 1024 * 1024


def _vmem_bytes(tile_m, tile_n, d_pad, cb, wb, ob, use_scratch):
    est = (2 * tile_m * d_pad * cb        # x tile (double-buffered)
           + 2 * d_pad * tile_n * wb      # W1 chunk
           + 2 * tile_n * d_pad * wb      # W2 chunk
           + 2 * 8 * tile_n * wb          # b1 chunk (sublane-padded to 8 rows)
           + 2 * 8 * d_pad * wb           # b2        (sublane-padded to 8 rows)
           + 2 * tile_m * d_pad * ob)     # output tile
    if use_scratch:
        est += tile_m * d_pad * 4         # f32 accumulator scratch
    return est


def _select_tiles(m, d_pad, dff_pad, cb, wb, ob, use_scratch, budget,
                  target_tm=512, target_tn=512):
    granule = 8 if (cb >= 4 and ob >= 4) else 16

    # tile_n candidates: full-residency first, then 128-multiple divisors of
    # dff_pad (so dff is never over-padded to a tile multiple), descending.
    q = dff_pad // 128
    divs = [128 * d for d in range(1, q + 1) if q % d == 0]
    tn_candidates = [dff_pad] + sorted(
        [t for t in divs if t <= target_tn and t != dff_pad], reverse=True)

    ntm = max(1, -(-m // target_tm))
    max_ntm = max(1, -(-m // granule))

    while True:
        tile_m = _round_up(-(-m // ntm), granule)
        m_pad = ntm * tile_m
        chosen = None
        for tile_n in tn_candidates:
            est = _vmem_bytes(tile_m, tile_n, d_pad, cb, wb, ob, use_scratch)
            if est <= budget:
                chosen = (tile_n, est)
                break
        if chosen is not None:
            tile_n, est = chosen
            # Weights VMEM-resident and only one M tile: split into 2 so both
            # v7x TensorCores get work (free when weights are resident; one
            # extra ~0.35us grid step elsewhere).
            if ntm == 1 and tile_n == dff_pad and m >= 256:
                ntm = 2
                tile_m = _round_up(-(-m // ntm), granule)
                m_pad = ntm * tile_m
                est = _vmem_bytes(tile_m, tile_n, d_pad, cb, wb, ob, use_scratch)
            return tile_m, m_pad, tile_n, est
        if ntm >= max_ntm:
            tile_n = tn_candidates[-1]
            est = _vmem_bytes(tile_m, tile_n, d_pad, cb, wb, ob, use_scratch)
            return tile_m, m_pad, tile_n, est
        ntm = min(max_ntm, ntm * 2)


# ----------------------------------------------------------------------------
# Parameter preparation (done ONCE, hoisted out of the forward path)
# ----------------------------------------------------------------------------
def prepare_params(w1, b1, w2, b2, dtype=jnp.bfloat16):
    """Pad weights/biases to lane-aligned shapes and cast to the compute dtype.

    w1: [d_model, dff], b1: [dff], w2: [dff, d_model], b2: [d_model]
    (stored as [in, out], i.e. already transposed relative to nn.Linear.weight).
    """
    d_model, dff = w1.shape
    d_pad = _round_up(d_model, 128)
    dff_pad = _round_up(dff, 128)
    w1_p = jnp.pad(w1.astype(dtype), ((0, d_pad - d_model), (0, dff_pad - dff)))
    b1_p = jnp.pad(b1.astype(dtype), (0, dff_pad - dff)).reshape(1, dff_pad)
    w2_p = jnp.pad(w2.astype(dtype), ((0, dff_pad - dff), (0, d_pad - d_model)))
    b2_p = jnp.pad(b2.astype(dtype), (0, d_pad - d_model)).reshape(1, d_pad)
    return w1_p, b1_p, w2_p, b2_p


# ----------------------------------------------------------------------------
# Forward pass
# ----------------------------------------------------------------------------
@functools.partial(jax.jit, static_argnames=("tile_m", "tile_n"))
def feed_forward(x, w1_p, b1_p, w2_p, b2_p, tile_m=512, tile_n=512):
    """x: [..., d_model]; padded params from prepare_params().

    Output dtype == x.dtype.  MXU operands use the weight storage dtype
    (bf16 recommended) with f32 accumulation.
    """
    orig_shape = x.shape
    d_model = orig_shape[-1]
    d_pad, dff_pad = w1_p.shape
    assert d_pad == _round_up(d_model, 128), "weights padded for a different d_model"

    out_dtype = x.dtype
    compute_dtype = w1_p.dtype
    use_scratch = out_dtype != jnp.float32

    x2 = x.reshape(-1, d_model).astype(compute_dtype)
    m = x2.shape[0]

    cb = jnp.dtype(compute_dtype).itemsize
    wb = jnp.dtype(w1_p.dtype).itemsize
    ob = jnp.dtype(out_dtype).itemsize

    vmem_cap = _vmem_capacity_bytes()
    budget = int(0.75 * vmem_cap)
    tile_m, m_pad, tile_n, vmem_est = _select_tiles(
        m, d_pad, dff_pad, cb, wb, ob, use_scratch, budget,
        target_tm=tile_m, target_tn=tile_n)

    # Per-call padding only touches activations (cheap); weights are pre-padded.
    x_p = jnp.pad(x2, ((0, m_pad - m), (0, d_pad - d_model)))

    vmem_limit = int(min(int(0.9 * vmem_cap),
                         max(vmem_est * 13 // 10, 32 * 1024 * 1024)))

    n_m_tiles = m_pad // tile_m
    n_n_tiles = dff_pad // tile_n
    weight_reads = 1 if n_n_tiles == 1 else n_m_tiles
    flops = 4 * m_pad * d_pad * dff_pad
    bytes_accessed = (x_p.size * cb
                      + weight_reads * (w1_p.size + w2_p.size) * wb
                      + (b1_p.size + b2_p.size) * wb
                      + m_pad * d_pad * ob)
    cost = pl.CostEstimate(flops=flops,
                           transcendentals=m_pad * dff_pad,
                           bytes_accessed=bytes_accessed)

    kernel = ff_kernel_scratch if use_scratch else ff_kernel_f32out
    scratch_shapes = ([pltpu.VMEM((tile_m, d_pad), jnp.float32)]
                      if use_scratch else [])

    out = pl.pallas_call(
        kernel,
        out_shape=jax.ShapeDtypeStruct((m_pad, d_pad), out_dtype),
        grid_spec=pltpu.PrefetchScalarGridSpec(
            num_scalar_prefetch=0,
            grid=(n_m_tiles, n_n_tiles),
            in_specs=[
                pl.BlockSpec((tile_m, d_pad), lambda i, n: (i, 0)),   # x rows
                pl.BlockSpec((d_pad, tile_n), lambda i, n: (0, n)),   # W1 chunk
                pl.BlockSpec((1, tile_n), lambda i, n: (0, n)),       # b1 chunk
                pl.BlockSpec((tile_n, d_pad), lambda i, n: (n, 0)),   # W2 chunk
                pl.BlockSpec((1, d_pad), lambda i, n: (0, 0)),        # b2
            ],
            out_specs=pl.BlockSpec((tile_m, d_pad), lambda i, n: (i, 0)),
            scratch_shapes=scratch_shapes,
        ),
        compiler_params=pltpu.CompilerParams(
            dimension_semantics=("parallel", "arbitrary"),
            vmem_limit_bytes=vmem_limit,
        ),
        cost_estimate=cost,
    )(x_p, w1_p, b1_p, w2_p, b2_p)

    return out[:m, :d_model].reshape(orig_shape)


def init_params(key, d_model, dff, dtype=jnp.float32):
    # Deterministic init mirroring nn.Linear's uniform(-1/sqrt(fan_in), 1/sqrt(fan_in)).
    k1, k2, k3, k4 = jax.random.split(key, 4)
    lim1 = 1.0 / math.sqrt(d_model)
    lim2 = 1.0 / math.sqrt(dff)
    # Stored as [in, out] so kernel does x @ W (== x @ linear.weight.T in torch).
    w1 = jax.random.uniform(k1, (d_model, dff), dtype, -lim1, lim1)
    b1 = jax.random.uniform(k2, (dff,), dtype, -lim1, lim1)
    w2 = jax.random.uniform(k3, (dff, d_model), dtype, -lim2, lim2)
    b2 = jax.random.uniform(k4, (d_model,), dtype, -lim2, lim2)
    return w1, b1, w2, b2


if __name__ == "__main__":
    d_model, dff = 32, 64
    batch, seq = 2, 8

    key = jax.random.PRNGKey(0)
    kx, kp = jax.random.split(key)
    x = jax.random.normal(kx, (batch, seq, d_model), jnp.float32)
    w1, b1, w2, b2 = init_params(kp, d_model, dff, jnp.float32)

    def ref_ff(x, w1, b1, w2, b2):
        h = x @ w1 + b1
        h = 0.5 * h * (1.0 + lax.erf(h / math.sqrt(2.0)))
        return h @ w2 + b2

    # f32 storage path (exercises the direct f32-output-accumulation kernel).
    p32 = prepare_params(w1, b1, w2, b2, dtype=jnp.float32)
    out32 = feed_forward(x, *p32)
    jax.block_until_ready(out32)
    ref32 = ref_ff(x, w1, b1, w2, b2)
    assert out32.shape == (batch, seq, d_model)
    assert jnp.allclose(out32, ref32, atol=1e-4, rtol=1e-4)

    # bf16 storage path (recommended on TPU: bf16 MXU operands, f32 accumulate).
    # Note: GELU output is rounded to bf16 before the second matmul (one extra
    # rounding vs a pure-f32 torch reference) -- covered by the tolerance.
    pbf = prepare_params(w1, b1, w2, b2, dtype=jnp.bfloat16)
    out_bf16 = feed_forward(x.astype(jnp.bfloat16), *pbf)
    jax.block_until_ready(out_bf16)
    ref_bf16 = ref_ff(*(a.astype(jnp.bfloat16).astype(jnp.float32)
                        for a in (x, w1, b1, w2, b2)))
    assert out_bf16.dtype == jnp.bfloat16
    assert jnp.allclose(out_bf16.astype(jnp.float32), ref_bf16,
                        atol=3e-2, rtol=3e-2)

    print("KERNEL_OK")
</pallas_src>

<mosaic_0001>
module attributes {stable_mosaic.version = 11 : i64} {
  func.func @ff_kernel_f32out(%arg0: i32, %arg1: i32, %arg2: memref<16x128xf32, #tpu.memory_space<vmem>>, %arg3: memref<128x128xf32, #tpu.memory_space<vmem>>, %arg4: memref<1x128xf32, #tpu.memory_space<vmem>>, %arg5: memref<128x128xf32, #tpu.memory_space<vmem>>, %arg6: memref<1x128xf32, #tpu.memory_space<vmem>>, %arg7: memref<16x128xf32, #tpu.memory_space<vmem>>) attributes {dimension_semantics = [#tpu.dimension_semantics<parallel>, #tpu.dimension_semantics<arbitrary>], iteration_bounds = array<i64: 1, 1>, scalar_prefetch = 0 : i64, scratch_operands = 0 : i64, tpu.core_type = #tpu.core_type<tc>, window_params = [{transform_indices = @transform_0, window_bounds = array<i64: 16, 128>}, {transform_indices = @transform_1, window_bounds = array<i64: 128, 128>}, {transform_indices = @transform_2, window_bounds = array<i64: 1, 128>}, {transform_indices = @transform_3, window_bounds = array<i64: 128, 128>}, {pipeline_mode = #tpu.pipeline_mode<synchronous>, transform_indices = @transform_4, window_bounds = array<i64: 1, 128>}, {transform_indices = @transform_5, window_bounds = array<i64: 16, 128>}]} {
    %c0 = arith.constant 0 : index
    %c0_0 = arith.constant 0 : index
    %0 = vector.load %arg2[%c0, %c0_0] : memref<16x128xf32, #tpu.memory_space<vmem>>, vector<16x128xf32>
    %c0_1 = arith.constant 0 : index
    %c0_2 = arith.constant 0 : index
    %1 = vector.load %arg3[%c0_1, %c0_2] : memref<128x128xf32, #tpu.memory_space<vmem>>, vector<128x128xf32>
    %cst = arith.constant dense<0.000000e+00> : vector<16x128xf32>
    %2 = tpu.matmul %0, %1, %cst {dimension_numbers = #tpu.dot_dimension_numbers<[1], [0], [0], [1], [0, 0, 1, 1], [], []>} : vector<16x128xf32>, vector<128x128xf32>, vector<16x128xf32> -> vector<16x128xf32>
    %c0_3 = arith.constant 0 : index
    %c0_4 = arith.constant 0 : index
    %3 = vector.load %arg4[%c0_3, %c0_4] : memref<1x128xf32, #tpu.memory_space<vmem>>, vector<1x128xf32>
    %4 = vector.broadcast %3 : vector<1x128xf32> to vector<16x128xf32>
    %5 = arith.addf %2, %4 : vector<16x128xf32>
    %cst_5 = arith.constant 5.000000e-01 : f32
    %6 = vector.broadcast %cst_5 : f32 to vector<16x128xf32>
    %7 = arith.mulf %6, %5 : vector<16x128xf32>
    %cst_6 = arith.constant 0.707106769 : f32
    %8 = vector.broadcast %cst_6 : f32 to vector<16x128xf32>
    %9 = arith.mulf %5, %8 : vector<16x128xf32>
    %10 = math.erf %9 : vector<16x128xf32>
    %cst_7 = arith.constant 1.000000e+00 : f32
    %11 = vector.broadcast %cst_7 : f32 to vector<16x128xf32>
    %12 = arith.addf %11, %10 : vector<16x128xf32>
    %13 = arith.mulf %7, %12 : vector<16x128xf32>
    %c0_8 = arith.constant 0 : index
    %c0_9 = arith.constant 0 : index
    %14 = vector.load %arg5[%c0_8, %c0_9] : memref<128x128xf32, #tpu.memory_space<vmem>>, vector<128x128xf32>
    %cst_10 = arith.constant dense<0.000000e+00> : vector<16x128xf32>
    %15 = tpu.matmul %13, %14, %cst_10 {dimension_numbers = #tpu.dot_dimension_numbers<[1], [0], [0], [1], [0, 0, 1, 1], [], []>} : vector<16x128xf32>, vector<128x128xf32>, vector<16x128xf32> -> vector<16x128xf32>
    %c0_i32 = arith.constant 0 : i32
    %16 = arith.cmpi eq, %arg1, %c0_i32 : i32
    %17 = arith.extui %16 : i1 to i32
    %c0_i32_11 = arith.constant 0 : i32
    %18 = arith.cmpi ne, %17, %c0_i32_11 : i32
    scf.if %18 {
      %c0_16 = arith.constant 0 : index
      %c0_17 = arith.constant 0 : index
      %25 = vector.load %arg7[%c0_16, %c0_17] : memref<16x128xf32, #tpu.memory_space<vmem>>, vector<16x128xf32>
      tpu.vector_store %arg7[%c0_16, %c0_17], %15 {strides = array<i32>} : memref<16x128xf32, #tpu.memory_space<vmem>>, vector<16x128xf32>,
    } else {
    }
    %c0_i32_12 = arith.constant 0 : i32
    %19 = arith.cmpi ne, %arg1, %c0_i32_12 : i32
    %20 = arith.extui %19 : i1 to i32
    %c0_i32_13 = arith.constant 0 : i32
    %21 = arith.cmpi ne, %20, %c0_i32_13 : i32
    scf.if %21 {
      %c0_16 = arith.constant 0 : index
      %c0_17 = arith.constant 0 : index
      %25 = vector.load %arg7[%c0_16, %c0_17] : memref<16x128xf32, #tpu.memory_space<vmem>>, vector<16x128xf32>
      %26 = arith.addf %25, %15 : vector<16x128xf32>
      %c0_18 = arith.constant 0 : index
      %c0_19 = arith.constant 0 : index
      %27 = vector.load %arg7[%c0_18, %c0_19] : memref<16x128xf32, #tpu.memory_space<vmem>>, vector<16x128xf32>
      tpu.vector_store %arg7[%c0_18, %c0_19], %26 {strides = array<i32>} : memref<16x128xf32, #tpu.memory_space<vmem>>, vector<16x128xf32>,
    } else {
    }
    %c0_i32_14 = arith.constant 0 : i32
    %22 = arith.cmpi eq, %arg1, %c0_i32_14 : i32
    %23 = arith.extui %22 : i1 to i32
    %c0_i32_15 = arith.constant 0 : i32
    %24 = arith.cmpi ne, %23, %c0_i32_15 : i32
    scf.if %24 {
      %c0_16 = arith.constant 0 : index
      %c0_17 = arith.constant 0 : index
      %25 = vector.load %arg7[%c0_16, %c0_17] : memref<16x128xf32, #tpu.memory_space<vmem>>, vector<16x128xf32>
      %c0_18 = arith.constant 0 : index
      %c0_19 = arith.constant 0 : index
      %26 = vector.load %arg6[%c0_18, %c0_19] : memref<1x128xf32, #tpu.memory_space<vmem>>, vector<1x128xf32>
      %27 = vector.broadcast %26 : vector<1x128xf32> to vector<16x128xf32>
      %28 = arith.addf %25, %27 : vector<16x128xf32>
      %c0_20 = arith.constant 0 : index
      %c0_21 = arith.constant 0 : index
      %29 = vector.load %arg7[%c0_20, %c0_21] : memref<16x128xf32, #tpu.memory_space<vmem>>, vector<16x128xf32>
      tpu.vector_store %arg7[%c0_20, %c0_21], %28 {strides = array<i32>} : memref<16x128xf32, #tpu.memory_space<vmem>>, vector<16x128xf32>,
    } else {
    }
    return
  }
  func.func @transform_0(%arg0: i32, %arg1: i32) -> (i32, i32) {
    %c0_i32 = arith.constant 0 : i32
    %c0_i32_0 = arith.constant 0 : i32
    return %arg0, %c0_i32 : i32, i32
  }
  func.func @transform_1(%arg0: i32, %arg1: i32) -> (i32, i32) {
    %c0_i32 = arith.constant 0 : i32
    %c0_i32_0 = arith.constant 0 : i32
    return %c0_i32, %arg1 : i32, i32
  }
  func.func @transform_2(%arg0: i32, %arg1: i32) -> (i32, i32) {
    %c0_i32 = arith.constant 0 : i32
    %c0_i32_0 = arith.constant 0 : i32
    return %c0_i32, %arg1 : i32, i32
  }
  func.func @transform_3(%arg0: i32, %arg1: i32) -> (i32, i32) {
    %c0_i32 = arith.constant 0 : i32
    %c0_i32_0 = arith.constant 0 : i32
    return %arg1, %c0_i32 : i32, i32
  }
  func.func @transform_4(%arg0: i32, %arg1: i32) -> (i32, i32) {
    %c0_i32 = arith.constant 0 : i32
    %c0_i32_0 = arith.constant 0 : i32
    %c0_i32_1 = arith.constant 0 : i32
    return %c0_i32, %c0_i32_0 : i32, i32
  }
  func.func @transform_5(%arg0: i32, %arg1: i32) -> (i32, i32) {
    %c0_i32 = arith.constant 0 : i32
    %c0_i32_0 = arith.constant 0 : i32
    return %arg0, %c0_i32 : i32, i32
  }
}

</mosaic_0001>

<llo_original>
// kernel: feed_forward.1
$region0: #{feed_forward.1}
  #allocation0 [shape = 'u32[]', space=smem, size = 0x4, offset = 0x4, fixed_abs, tag = 'smem constant byte address 0x4 - core index']
  #allocation1 [shape = 'u32[144,128]{1,0:T(1,128)}', space=vmem, size = 0x12000, scoped, tag = 'internal scratch']
  %s0 = inlined_call_operand.vmem [shape: f32[16,128], index: 0, kind: input, shape index: {}]
  %s1 = inlined_call_operand.hbm [shape: f32[128,128], index: 1, kind: input, shape index: {}]
  %s2 = inlined_call_operand.vmem [shape: f32[1,128], index: 2, kind: input, shape index: {}]
  %s3 = inlined_call_operand.hbm [shape: f32[128,128], index: 3, kind: input, shape index: {}]
  %s4 = inlined_call_operand.vmem [shape: f32[1,128], index: 4, kind: input, shape index: {}]
  %s5 = inlined_call_operand.vmem [shape: f32[16,128], index: 5, kind: output, shape index: {}]
  %s6 = sld [smem:[#allocation0]]
  $region50: #{feed_forward.1} parent=0
    _
  %s8 = ssub.s32 1, %s6
  %s9 = scalar_select 0, %s8, %s6
  $region1: #{feed_forward.1} parent=0
    #allocation2 [shape = 'u8[65536]{0}', space=vmem, size = 0x10000, scoped, tag = 'input window, operand 1, single buffered']
    #allocation3 [shape = 's32[1]{0}', space=sflag, size = 0x4, scoped, tag = 'scoped memory for feed_forward.1']
    #allocation4 [shape = 'u8[65536]{0}', space=vmem, size = 0x10000, scoped, tag = 'input window, operand 3, single buffered']
    #allocation5 [shape = 's32[1]{0}', space=sflag, size = 0x4, scoped, tag = 'scoped memory for feed_forward.1']
    %10 = vsyncpa [#allocation3], 0
    %11 = vsyncpa [#allocation5], 0
    // Predicated region
    $region2: #{feed_forward.1} parent=1 // pred_check
      _
    $region3: #{feed_forward.1} parent=1 // pred_check_branch
      %13 = sbr.rel (0) target = $region5
    $region4: #{feed_forward.1} parent=1 // pred_region
      _
    $region5: #{feed_forward.1} parent=1 // pred_fallthru
      _
    // Predicated region
    $region6: #{feed_forward.1} parent=1 // pred_check
      _
    $region7: #{feed_forward.1} parent=1 // pred_check_branch
      %15 = sbr.rel (0) target = $region9
    $region8: #{feed_forward.1} parent=1 // pred_region
      %s17 = ssub.s32 2048, 2048
      %18 = vsyncadd [#allocation3], %s17
      %s19 = sshll.u32 [#allocation2], 4
      %s20 = int_to_ptr.vmem [resolvable:$true] %s19
      %25 = dma.hbm_to_vmem [thread:$0]  %s1, 2048, %s20, [#allocation3], 128, 128, 8
    $region9: #{feed_forward.1} parent=1 // pred_fallthru
      _
    // Predicated region
    $region10: #{feed_forward.1} parent=1 // pred_check
      _
    $region11: #{feed_forward.1} parent=1 // pred_check_branch
      %27 = sbr.rel (0) target = $region13
    $region12: #{feed_forward.1} parent=1 // pred_region
      _
    $region13: #{feed_forward.1} parent=1 // pred_fallthru
      _
    // Predicated region
    $region14: #{feed_forward.1} parent=1 // pred_check
      _
    $region15: #{feed_forward.1} parent=1 // pred_check_branch
      %29 = sbr.rel (0) target = $region17
    $region16: #{feed_forward.1} parent=1 // pred_region
      %s31 = ssub.s32 2048, 2048
      %32 = vsyncadd [#allocation5], %s31
      %s33 = sshll.u32 [#allocation4], 4
      %s34 = int_to_ptr.vmem [resolvable:$true] %s33
      %39 = dma.hbm_to_vmem [thread:$0]  %s3, 2048, %s34, [#allocation5], 128, 128, 8
    $region17: #{feed_forward.1} parent=1 // pred_fallthru
      _
    // Predicated region
    $region18: #{feed_forward.1} parent=1 // pred_check
      _
    $region19: #{feed_forward.1} parent=1 // pred_check_branch
      %41 = sbr.rel (0) target = $region21
    $region20: #{feed_forward.1} parent=1 // pred_region
      _
    $region21: #{feed_forward.1} parent=1 // pred_fallthru
      _
    // Predicated region
    $region22: #{feed_forward.1} parent=1 // pred_check
      _
    $region23: #{feed_forward.1} parent=1 // pred_check_branch
      %43 = sbr.rel (0) target = $region25
    $region24: #{feed_forward.1} parent=1 // pred_region
      %44 = dma.done [#allocation3], 2048
    $region25: #{feed_forward.1} parent=1 // pred_fallthru
      _
    // Predicated region
    $region26: #{feed_forward.1} parent=1 // pred_check
      _
    $region27: #{feed_forward.1} parent=1 // pred_check_branch
      %46 = sbr.rel (0) target = $region29
    $region28: #{feed_forward.1} parent=1 // pred_region
      %47 = dma.done [#allocation5], 2048
    $region29: #{feed_forward.1} parent=1 // pred_fallthru
      _
    %v48 = vld [vmem:[%s0] sm:$0xff]
    %v49 = vld [vmem:[%s0 + $0x8] sm:$0xff]
    %v50 = vld [vmem:[#allocation2] sm:$0xff]
    %v51 = vld [vmem:[#allocation2 + $0x8] sm:$0xff]
    %v52 = vld [vmem:[#allocation2 + $0x10] sm:$0xff]
    %v53 = vld [vmem:[#allocation2 + $0x18] sm:$0xff]
    %v54 = vld [vmem:[#allocation2 + $0x20] sm:$0xff]
    %v55 = vld [vmem:[#allocation2 + $0x28] sm:$0xff]
    %v56 = vld [vmem:[#allocation2 + $0x30] sm:$0xff]
    %v57 = vld [vmem:[#allocation2 + $0x38] sm:$0xff]
    %v58 = vld [vmem:[#allocation2 + $0x40] sm:$0xff]
    %v59 = vld [vmem:[#allocation2 + $0x48] sm:$0xff]
    %v60 = vld [vmem:[#allocation2 + $0x50] sm:$0xff]
    %v61 = vld [vmem:[#allocation2 + $0x58] sm:$0xff]
    %v62 = vld [vmem:[#allocation2 + $0x60] sm:$0xff]
    %v63 = vld [vmem:[#allocation2 + $0x68] sm:$0xff]
    %v64 = vld [vmem:[#allocation2 + $0x70] sm:$0xff]
    %v65 = vld [vmem:[#allocation2 + $0x78] sm:$0xff]
    %v66 = vld [vmem:[%s2] sm:$0x1]
    %v68 = vlaneseq
    %v69 = vshrl.u32 %v68, 7
    %v70 = vsub.s32 0, %v69
    %v71 = vrot.slane %v66, %v70
    %73 = vmatprep.subr.mxu0 0.0
    %74 = vmatpush1.msra.mxu0 %v50
    %75 = vmatprep.subr.mxu0 0.0
    %76 = vmatpush1.msra.mxu0 %v51
    %77 = vmatprep.subr.mxu0 0.0
    %78 = vmatpush1.msra.mxu0 %v52
    %79 = vmatprep.subr.mxu0 0.0
    %80 = vmatpush1.msra.mxu0 %v53
    %81 = vmatprep.subr.mxu0 0.0
    %82 = vmatpush1.msra.mxu0 %v54
    %83 = vmatprep.subr.mxu0 0.0
    %84 = vmatpush1.msra.mxu0 %v55
    %85 = vmatprep.subr.mxu0 0.0
    %86 = vmatpush1.msra.mxu0 %v56
    %87 = vmatprep.subr.mxu0 0.0
    %88 = vmatpush1.msra.mxu0 %v57
    %89 = vmatprep.subr.mxu0 0.0
    %90 = vmatpush1.msra.mxu0 %v58
    %91 = vmatprep.subr.mxu0 0.0
    %92 = vmatpush1.msra.mxu0 %v59
    %93 = vmatprep.subr.mxu0 0.0
    %94 = vmatpush1.msra.mxu0 %v60
    %95 = vmatprep.subr.mxu0 0.0
    %96 = vmatpush1.msra.mxu0 %v61
    %97 = vmatprep.subr.mxu0 0.0
    %98 = vmatpush1.msra.mxu0 %v62
    %99 = vmatprep.subr.mxu0 0.0
    %100 = vmatpush1.msra.mxu0 %v63
    %101 = vmatprep.subr.mxu0 0.0
    %102 = vmatpush1.msra.mxu0 %v64
    %103 = vmatprep.subr.mxu0 0.0
    %104 = vmatpush1.msra.mxu0 %v65
    %105 = vmatprep.subr.mxu0 0.0
    %106 = vmatpush1.msra.mxu0 0.0
    %107 = vmatprep.subr.mxu0 0.0
    %108 = vmatpush1.msra.mxu0 0.0
    %109 = vmatprep.subr.mxu0 0.0
    %110 = vmatpush1.msra.mxu0 0.0
    %111 = vmatprep.subr.mxu0 0.0
    %112 = vmatpush1.msra.mxu0 0.0
    %113 = vmatprep.subr.mxu0 0.0
    %114 = vmatpush1.msra.mxu0 0.0
    %115 = vmatprep.subr.mxu0 0.0
    %116 = vmatpush1.msra.mxu0 0.0
    %117 = vmatprep.subr.mxu0 0.0
    %118 = vmatpush1.msra.mxu0 0.0
    %119 = vmatprep.subr.mxu0 0.0
    %120 = vmatpush1.msra.mxu0 0.0
    %121 = vmatprep.subr.mxu0 0.0
    %122 = vmatpush1.msra.mxu0 0.0
    %123 = vmatprep.subr.mxu0 0.0
    %124 = vmatpush1.msra.mxu0 0.0
    %125 = vmatprep.subr.mxu0 0.0
    %126 = vmatpush1.msra.mxu0 0.0
    %127 = vmatprep.subr.mxu0 0.0
    %128 = vmatpush1.msra.mxu0 0.0
    %129 = vmatprep.subr.mxu0 0.0
    %130 = vmatpush1.msra.mxu0 0.0
    %131 = vmatprep.subr.mxu0 0.0
    %132 = vmatpush1.msra.mxu0 0.0
    %133 = vmatprep.subr.mxu0 0.0
    %134 = vmatpush1.msra.mxu0 0.0
    %135 = vmatprep.subr.mxu0 0.0
    %136 = vmatpush1.msra.mxu0 0.0
    %137 = vmatprep.mubr.f32.mxu0 0.0
    %138 = vmatmul.mubr.f32.gmra.mrb[0].mxu0 %v48
    %v139 = vpop.f32.mrb[0].mxu0
    %v140 = vadd.f32 %v71, %v139
    %v141 = vpop.f32.mrb[0].mxu0
    %142 = vmatprep.mubr.f32.mxu0 0.0
    %143 = vmatmul.mubr.f32.gmra.mrb[0].mxu0 %v49
    %v144 = vpop.f32.mrb[0].mxu0
    %v145 = vadd.f32 %v71, %v144
    %v146 = vpop.f32.mrb[0].mxu0
    %147 = vdwg.mxu0
    %v148 = vmul.f32 %v140, 0.5
    %v149 = vmul.f32 %v145, 0.5
    %v150 = vmul.f32 %v140, 0.70710677
    %v151 = vmul.f32 %v145, 0.70710677
    %v152 = verf.f32.pop %v150
    %v153 = verf.f32.pop %v151
    %v154 = vadd.f32 %v152, 1.0
    %v155 = vadd.f32 %v153, 1.0
    %v156 = vmul.f32 %v148, %v154
    %v157 = vmul.f32 %v149, %v155
    %v158 = vld [vmem:[#allocation4] sm:$0xff]
    %v159 = vld [vmem:[#allocation4 + $0x8] sm:$0xff]
    %v160 = vld [vmem:[#allocation4 + $0x10] sm:$0xff]
    %v161 = vld [vmem:[#allocation4 + $0x18] sm:$0xff]
    %v162 = vld [vmem:[#allocation4 + $0x20] sm:$0xff]
    %v163 = vld [vmem:[#allocation4 + $0x28] sm:$0xff]
    %v164 = vld [vmem:[#allocation4 + $0x30] sm:$0xff]
    %v165 = vld [vmem:[#allocation4 + $0x38] sm:$0xff]
    %v166 = vld [vmem:[#allocation4 + $0x40] sm:$0xff]
    %v167 = vld [vmem:[#allocation4 + $0x48] sm:$0xff]
    %v168 = vld [vmem:[#allocation4 + $0x50] sm:$0xff]
    %v169 = vld [vmem:[#allocation4 + $0x58] sm:$0xff]
    %v170 = vld [vmem:[#allocation4 + $0x60] sm:$0xff]
    %v171 = vld [vmem:[#allocation4 + $0x68] sm:$0xff]
    %v172 = vld [vmem:[#allocation4 + $0x70] sm:$0xff]
    %v173 = vld [vmem:[#allocation4 + $0x78] sm:$0xff]
    %174 = vmatprep.subr.mxu0 0.0
    %175 = vmatpush1.msra.mxu0 %v158
    %176 = vmatprep.subr.mxu0 0.0
    %177 = vmatpush1.msra.mxu0 %v159
    %178 = vmatprep.subr.mxu0 0.0
    %179 = vmatpush1.msra.mxu0 %v160
    %180 = vmatprep.subr.mxu0 0.0
    %181 = vmatpush1.msra.mxu0 %v161
    %182 = vmatprep.subr.mxu0 0.0
    %183 = vmatpush1.msra.mxu0 %v162
    %184 = vmatprep.subr.mxu0 0.0
    %185 = vmatpush1.msra.mxu0 %v163
    %186 = vmatprep.subr.mxu0 0.0
    %187 = vmatpush1.msra.mxu0 %v164
    %188 = vmatprep.subr.mxu0 0.0
    %189 = vmatpush1.msra.mxu0 %v165
    %190 = vmatprep.subr.mxu0 0.0
    %191 = vmatpush1.msra.mxu0 %v166
    %192 = vmatprep.subr.mxu0 0.0
    %193 = vmatpush1.msra.mxu0 %v167
    %194 = vmatprep.subr.mxu0 0.0
    %195 = vmatpush1.msra.mxu0 %v168
    %196 = vmatprep.subr.mxu0 0.0
    %197 = vmatpush1.msra.mxu0 %v169
    %198 = vmatprep.subr.mxu0 0.0
    %199 = vmatpush1.msra.mxu0 %v170
    %200 = vmatprep.subr.mxu0 0.0
    %201 = vmatpush1.msra.mxu0 %v171
    %202 = vmatprep.subr.mxu0 0.0
    %203 = vmatpush1.msra.mxu0 %v172
    %204 = vmatprep.subr.mxu0 0.0
    %205 = vmatpush1.msra.mxu0 %v173
    %206 = vmatprep.subr.mxu0 0.0
    %207 = vmatpush1.msra.mxu0 0.0
    %208 = vmatprep.subr.mxu0 0.0
    %209 = vmatpush1.msra.mxu0 0.0
    %210 = vmatprep.subr.mxu0 0.0
    %211 = vmatpush1.msra.mxu0 0.0
    %212 = vmatprep.subr.mxu0 0.0
    %213 = vmatpush1.msra.mxu0 0.0
    %214 = vmatprep.subr.mxu0 0.0
    %215 = vmatpush1.msra.mxu0 0.0
    %216 = vmatprep.subr.mxu0 0.0
    %217 = vmatpush1.msra.mxu0 0.0
    %218 = vmatprep.subr.mxu0 0.0
    %219 = vmatpush1.msra.mxu0 0.0
    %220 = vmatprep.subr.mxu0 0.0
    %221 = vmatpush1.msra.mxu0 0.0
    %222 = vmatprep.subr.mxu0 0.0
    %223 = vmatpush1.msra.mxu0 0.0
    %224 = vmatprep.subr.mxu0 0.0
    %225 = vmatpush1.msra.mxu0 0.0
    %226 = vmatprep.subr.mxu0 0.0
    %227 = vmatpush1.msra.mxu0 0.0
    %228 = vmatprep.subr.mxu0 0.0
    %229 = vmatpush1.msra.mxu0 0.0
    %230 = vmatprep.subr.mxu0 0.0
    %231 = vmatpush1.msra.mxu0 0.0
    %232 = vmatprep.subr.mxu0 0.0
    %233 = vmatpush1.msra.mxu0 0.0
    %234 = vmatprep.subr.mxu0 0.0
    %235 = vmatpush1.msra.mxu0 0.0
    %236 = vmatprep.subr.mxu0 0.0
    %237 = vmatpush1.msra.mxu0 0.0
    %238 = vmatprep.mubr.f32.mxu0 0.0
    %239 = vmatmul.mubr.f32.gmra.mrb[0].mxu0 %v156
    %v240 = vpop.f32.mrb[0].mxu0
    %v241 = vadd.f32 0.0, %v240
    %v242 = vpop.f32.mrb[0].mxu0
    %243 = vmatprep.mubr.f32.mxu0 0.0
    %244 = vmatmul.mubr.f32.gmra.mrb[0].mxu0 %v157
    %v245 = vpop.f32.mrb[0].mxu0
    %v246 = vadd.f32 0.0, %v245
    %v247 = vpop.f32.mrb[0].mxu0
    %248 = vdwg.mxu0
    %p249 = scmp.eq.s32.totalorder 0, 0
    // Predicated region
    $region30: #{feed_forward.1} parent=1 // pred_check
      %p250 = pneg %p249
    $region31: #{feed_forward.1} parent=1 // pred_check_branch
      %252 = sbr.rel (%p250) target = $region33
    $region32: #{feed_forward.1} parent=1 // pred_region
      %253 = vst [vmem:[%s5] sm:$0xff] %v241
      %254 = vst [vmem:[%s5 + $0x8] sm:$0xff] %v246
    $region33: #{feed_forward.1} parent=1 // pred_fallthru
      _
    %p255 = scmp.ne.s32.totalorder 0, 0
    // Predicated region
    $region34: #{feed_forward.1} parent=1 // pred_check
      %p256 = pneg %p255
    $region35: #{feed_forward.1} parent=1 // pred_check_branch
      %258 = sbr.rel (%p256) target = $region37
    $region36: #{feed_forward.1} parent=1 // pred_region
      %v259 = vld [vmem:[%s5] sm:$0xff]
      %v260 = vld [vmem:[%s5 + $0x8] sm:$0xff]
      %v261 = vadd.f32 %v259, %v241
      %v262 = vadd.f32 %v260, %v246
      %263 = vst [vmem:[%s5] sm:$0xff] %v261
      %264 = vst [vmem:[%s5 + $0x8] sm:$0xff] %v262
    $region37: #{feed_forward.1} parent=1 // pred_fallthru
      _
    // Predicated region
    $region38: #{feed_forward.1} parent=1 // pred_check
      %p265 = pneg %p249
    $region39: #{feed_forward.1} parent=1 // pred_check_branch
      %267 = sbr.rel (%p265) target = $region41
    $region40: #{feed_forward.1} parent=1 // pred_region
      %v268 = vld [vmem:[%s5] sm:$0xff]
      %v269 = vld [vmem:[%s5 + $0x8] sm:$0xff]
      %v270 = vld [vmem:[%s4] sm:$0x1]
      %v272 = vlaneseq
      %v273 = vshrl.u32 %v272, 7
      %v274 = vsub.s32 0, %v273
      %v275 = vrot.slane %v270, %v274
      %v277 = vadd.f32 %v268, %v275
      %v278 = vadd.f32 %v269, %v275
      %279 = vst [vmem:[%s5] sm:$0xff] %v277
      %280 = vst [vmem:[%s5 + $0x8] sm:$0xff] %v278
    $region41: #{feed_forward.1} parent=1 // pred_fallthru
      _
    // Predicated region
    $region42: #{feed_forward.1} parent=1 // pred_check
      _
    $region43: #{feed_forward.1} parent=1 // pred_check_branch
      %282 = sbr.rel (0) target = $region45
    $region44: #{feed_forward.1} parent=1 // pred_region
      _
    $region45: #{feed_forward.1} parent=1 // pred_fallthru
      _
    // Predicated region
    $region46: #{feed_forward.1} parent=1 // pred_check
      _
    $region47: #{feed_forward.1} parent=1 // pred_check_branch
      %284 = sbr.rel (0) target = $region49
    $region48: #{feed_forward.1} parent=1 // pred_region
      _
    $region49: #{feed_forward.1} parent=1 // pred_fallthru
      _
    %285 = vsyncpa [#allocation3], 1
    %286 = vsyncpa [#allocation5], 1

</llo_original>
